<compile_context>
chip_gen: v6e
topology: v6e:2x2x1
jax: 0.10.0
libtpu: 0.0.40
codegen_flags: <defaults>
</compile_context>

<pallas_src>
import functools
import math

import jax
import jax.numpy as jnp
from jax.experimental import pallas as pl
from jax.experimental.pallas import tpu as pltpu


# --------------------------------- helpers -----------------------------------


def _round_up(x, m):
    return ((x + m - 1) // m) * m


def _buf_vmem_bytes(shape, dtype):
    """Rough padded VMEM footprint of one buffer ((sublane, 128) tile padding)."""
    item = jnp.dtype(dtype).itemsize
    if len(shape) == 0:
        return item
    if len(shape) == 1:
        return _round_up(shape[0] * item, 512)
    sub = 8 * max(4 // item, 1)
    lead = 1
    for s in shape[:-2]:
        lead *= s
    return lead * _round_up(shape[-2], sub) * _round_up(shape[-1], 128) * item


def _pick_batch_block(n_batch, HW):
    """Samples per grid step: keep the stacked-GEMM M (= 2*NB*HW) >= 256 when
    possible while leaving >= 2 grid steps so the v7x 'parallel' axis can split
    across both TensorCores; otherwise the largest divisor of the batch <= 16."""
    for nb in range(min(n_batch, 16), 0, -1):
        if n_batch % nb == 0 and 2 * nb * HW >= 256 and n_batch // nb >= 2:
            return nb
    for nb in range(min(n_batch, 16), 0, -1):
        if n_batch % nb == 0:
            return nb
    return 1


def _make_tap_masks(H, W, NB):
    """(2*NB*H*W, 9) float mask: tap (kh, kw) of output pixel (y, x) is valid
    iff the shifted source stays inside the same image.  Emulates the zero
    padding of the 3x3 'same' conv when it is expressed as masked row shifts
    of the flattened (sample, y, x) row dimension."""
    HW = H * W
    ys = jnp.arange(H, dtype=jnp.int32).reshape(H, 1)
    xs = jnp.arange(W, dtype=jnp.int32).reshape(1, W)
    cols = []
    for kh in range(3):
        for kw in range(3):
            dy, dx = kh - 1, kw - 1
            ok = ((ys + dy >= 0) & (ys + dy < H) &
                  (xs + dx >= 0) & (xs + dx < W))
            cols.append(ok.reshape(HW, 1).astype(jnp.float32))
    m = jnp.concatenate(cols, axis=1)          # (HW, 9)
    return jnp.tile(m, (2 * NB, 1))            # f-path | JVP-path stacked rows


# --------------------- fused CNF-block (whole RK4 solve) ---------------------


def _make_cnf_solver(n_batch, NB, H, W, C, specs, T, n_steps):
    """Build one Pallas kernel that integrates d[x, logp]/dt = [f, -div f] for a
    whole CNF block with fixed-step RK4, entirely in VMEM.

    specs: tuple of (cin, cout) per ConcatConv2d layer (time channel already
    folded into a per-pixel bias map).  Grid is over batch blocks of NB samples.
    """
    L = len(specs)
    HW = H * W
    M1 = NB * HW                 # rows of the f-path (== rows of the JVP path)
    M = 2 * M1                   # f-path and JVP-path stacked along GEMM M
    MARGIN = _round_up(W + 1, 8)  # aligned shift margin for the row buffer
    dt = float(T) / int(n_steps)
    assert specs[-1][1] == C

    def kernel(*refs):
        x_ref, e_ref, m9_ref = refs[0], refs[1], refs[2]
        w_refs = [refs[3 + 3 * l] for l in range(L)]
        b_refs = [refs[4 + 3 * l] for l in range(L)]
        tm_refs = [refs[5 + 3 * l] for l in range(L)]
        n_in = 3 + 3 * L
        xo_ref, lp_ref = refs[n_in], refs[n_in + 1]
        scr = refs[n_in + 2:]
        buf_refs = [scr[2 * l] for l in range(L)]
        col_refs = [scr[2 * l + 1] for l in range(L)]

        # Zero the shift margins of every layer's row buffer once per grid step
        # (unconditional -> megacore-safe; the interior is fully overwritten
        # before every use, only the margins must stay benign / finite).
        for l in range(L):
            cin = specs[l][0]
            zeros_m = jnp.zeros((MARGIN, cin), jnp.float32)
            buf_refs[l][0:MARGIN, :] = zeros_m
            buf_refs[l][MARGIN + M:MARGIN + M + MARGIN, :] = zeros_m

        e2 = e_ref[...]                                    # (M1, C) f32 noise
        m9 = m9_ref[...]                                   # (M, 9)  f32 masks
        mcols = [m9[:, t:t + 1] for t in range(9)]         # hoisted per-tap masks

        def f_aug(xs, t):
            """dx/dt and Hutchinson e^T J e at state xs and time t (Python const)."""
            hd = jnp.concatenate([xs, e2], axis=0)         # (M, C): f | JVP path
            f = None
            div = None
            for l in range(L):
                cin, cout = specs[l]
                buf, col = buf_refs[l], col_refs[l]
                buf[MARGIN:MARGIN + M, :] = hd
                # im2col: fold the 9 conv taps into the contraction dimension.
                for kh in range(3):
                    for kw in range(3):
                        t9 = kh * 3 + kw
                        off = (kh - 1) * W + (kw - 1)
                        s0 = MARGIN + off
                        tap = buf[s0:s0 + M, :] * mcols[t9]
                        col[:, t9 * cin:(t9 + 1) * cin] = tap.astype(jnp.bfloat16)
                both = jnp.dot(col[...], w_refs[l][...],
                               preferred_element_type=jnp.float32)   # (M, cout)
                pre = both[:M1] + (b_refs[l][...] + t * tm_refs[l][...])
                dpre = both[M1:]
                if l < L - 1:
                    # softplus + its derivative, sharing a single exp().
                    ex = jnp.exp(-jnp.abs(pre))
                    den = 1.0 + ex
                    inv = 1.0 / den                       # exact (unbiased div)
                    sp = jnp.maximum(pre, 0.0) + jnp.log(den)
                    sg = jnp.where(pre >= 0.0, inv, ex * inv)
                    hd = jnp.concatenate([sp, sg * dpre], axis=0)
                else:
                    f = pre                               # (M1, C) = dx/dt
                    prod = (e2 * dpre).reshape(NB, HW, C)
                    div = jnp.sum(jnp.sum(prod, axis=2, keepdims=True),
                                  axis=1, keepdims=True).reshape(NB, 1)
            return f, div

        x = x_ref[...]                                     # (M1, C)
        lp = jnp.zeros((NB, 1), jnp.float32)
        for step in range(int(n_steps)):                   # fixed-step RK4, unrolled
            t0 = step * dt
            k1, d1 = f_aug(x, t0)
            k2, d2 = f_aug(x + (0.5 * dt) * k1, t0 + 0.5 * dt)
            k3, d3 = f_aug(x + (0.5 * dt) * k2, t0 + 0.5 * dt)
            k4, d4 = f_aug(x + dt * k3, t0 + dt)
            x = x + (dt / 6.0) * (k1 + 2.0 * k2 + 2.0 * k3 + k4)
            lp = lp - (dt / 6.0) * (d1 + 2.0 * d2 + 2.0 * d3 + d4)
        xo_ref[...] = x
        lp_ref[...] = jnp.broadcast_to(lp, (NB, 128))      # lane-dense delta-logp

    bs_state = pl.BlockSpec((M1, C), lambda i: (i, 0))
    in_specs = [bs_state, bs_state, pl.BlockSpec((M, 9), lambda i: (0, 0))]
    scratch = []
    est_bufs = [((M1, C), jnp.float32)] * 2 + [((M, 9), jnp.float32)]
    for (cin, cout) in specs:
        in_specs += [pl.BlockSpec((9 * cin, cout), lambda i: (0, 0)),
                     pl.BlockSpec((1, cout), lambda i: (0, 0)),
                     pl.BlockSpec((M1, cout), lambda i: (0, 0))]
        scratch += [pltpu.VMEM((M + 2 * MARGIN, cin), jnp.float32),
                    pltpu.VMEM((M, 9 * cin), jnp.bfloat16)]
        est_bufs += [((9 * cin, cout), jnp.bfloat16), ((1, cout), jnp.float32),
                     ((M1, cout), jnp.float32),
                     ((M + 2 * MARGIN, cin), jnp.float32),
                     ((M, 9 * cin), jnp.bfloat16)]
    est_bufs += [((M1, C), jnp.float32), ((NB, 128), jnp.float32)]

    est = sum(_buf_vmem_bytes(s, d) for (s, d) in est_bufs)
    # Keep the budget under ~48 MiB so the same kernel fits v7x's 64 MiB/TC.
    vmem_limit = int(min(48 * 2 ** 20, max(32 * 2 ** 20, 3 * est)))

    call = pl.pallas_call(
        kernel,
        out_shape=(jax.ShapeDtypeStruct((n_batch * HW, C), jnp.float32),
                   jax.ShapeDtypeStruct((n_batch, 128), jnp.float32)),
        grid_spec=pltpu.PrefetchScalarGridSpec(
            num_scalar_prefetch=0,
            grid=(n_batch // NB,),
            in_specs=in_specs,
            out_specs=[bs_state, pl.BlockSpec((NB, 128), lambda i: (i, 0))],
            scratch_shapes=scratch),
        compiler_params=pltpu.CompilerParams(
            dimension_semantics=("parallel",),
            vmem_limit_bytes=vmem_limit),
    )
    return jax.jit(call)


# ------------------------------ logit transform ------------------------------


def _logit_kernel(x_ref, y_ref, ld_ref, *, alpha):
    # ffjord LogitTransform forward on a lane-dense (rows, D) view.
    x = x_ref[...]
    s = alpha + (1.0 - 2.0 * alpha) * x
    y_ref[...] = jnp.log(s) - jnp.log(1.0 - s)
    ldg = math.log(1.0 - 2.0 * alpha) - jnp.log(s) - jnp.log(1.0 - s)
    ld_ref[...] = jnp.sum(ldg, axis=1, keepdims=True)


def logit_transform(x_nchw, alpha):
    n = x_nchw.shape[0]
    d = 1
    for s in x_nchw.shape[1:]:
        d *= s
    x2 = x_nchw.reshape(n, d)            # lane-dense: D is a multiple of 128
    rb = min(n, 256)
    while n % rb:
        rb -= 1
    y2, ld = pl.pallas_call(
        functools.partial(_logit_kernel, alpha=float(alpha)),
        out_shape=(jax.ShapeDtypeStruct((n, d), jnp.float32),
                   jax.ShapeDtypeStruct((n, 1), jnp.float32)),
        grid=(n // rb,),
        in_specs=[pl.BlockSpec((rb, d), lambda i: (i, 0))],
        out_specs=(pl.BlockSpec((rb, d), lambda i: (i, 0)),
                   pl.BlockSpec((rb, 1), lambda i: (i, 0))),
        compiler_params=pltpu.CompilerParams(
            dimension_semantics=("parallel",)),
    )(x2)
    return y2.reshape(x_nchw.shape), ld


# ------------------------------ flow components ------------------------------


def make_odenet_params(key, c, hidden_dims):
    """ConcatConv2d stack: dims = hidden_dims + (c,), each conv sees Cin+1 (time ch)."""
    dims = list(hidden_dims) + [c]
    params = []
    cin = c
    for dout in dims:
        key, k1, k2 = jax.random.split(key, 3)
        w = 0.05 * jax.random.normal(k1, (3, 3, cin + 1, dout), jnp.float32)
        b = 0.05 * jax.random.normal(k2, (dout,), jnp.float32)
        params.append((w, b))
        cin = dout
    return params, key


def squeeze_nchw(x, factor=2):
    """ffjord SqueezeLayer: (B,C,H,W) -> (B, C*f*f, H/f, W/f)."""
    n, c, h, w = x.shape
    x = x.reshape(n, c, h // factor, factor, w // factor, factor)
    x = jnp.transpose(x, (0, 1, 3, 5, 2, 4))
    return x.reshape(n, c * factor * factor, h // factor, w // factor)


# ---------------------------------- ODENVP -----------------------------------


class ODENVPPallas:
    def __init__(self, input_size, n_blocks=1, intermediate_dims=(16,),
                 nonlinearity="softplus", squash_input=True, alpha=0.05,
                 T=1.0, n_ode_steps=2, atol=1e-5, rtol=1e-5,
                 y_class=10, condition_ratio=1.0, seed=0):
        assert nonlinearity == "softplus"
        self.alpha = alpha
        self.squash_input = squash_input
        self.T = float(T)
        self.n_ode_steps = int(n_ode_steps)
        self.atol = atol
        self.rtol = rtol
        self.n_blocks = n_blocks
        self.n_scale = self._calc_n_scale(input_size)
        assert self.n_scale > 0

        key = jax.random.PRNGKey(seed)
        self.noise_key = jax.random.PRNGKey(seed + 1)

        n_batch, c, h, w = input_size   # solvers are specialized to this batch
        self.scales = []
        for i in range(self.n_scale):
            squeeze = i < self.n_scale - 1
            pre = []
            for j in range(n_blocks):
                params, key = make_odenet_params(key, c, intermediate_dims)
                a = atol * 0.1 if j == 0 else atol   # first CNF per scale: "hightol"
                r = rtol * 0.1 if j == 0 else rtol
                pre.append(self._prep_cnf_block(params, n_batch, c, h, w, a, r))
            post = []
            if squeeze:
                for _ in range(n_blocks):
                    params, key = make_odenet_params(key, c * 4, intermediate_dims)
                    post.append(self._prep_cnf_block(params, n_batch, c * 4,
                                                     h // 2, w // 2, atol, rtol))
            self.scales.append(dict(
                squeeze=squeeze, pre=pre, post=post,
                init_logit=(squash_input and alpha > 0 and i == 0)))
            c, h, w = c * 2, h // 2, w // 2

        self.dims = [o[1:] for o in self.calc_output_size(input_size)]

        # Parameters present in the PyTorch __init__ but unused by _logdensity:
        _, c0, h0, w0 = input_size
        Cc = int(c0 * h0 * w0 * condition_ratio)
        self.project_ycond_w = jnp.zeros((2 * Cc, y_class), jnp.float32)  # LinearZeros
        self.project_ycond_b = jnp.zeros((2 * Cc,), jnp.float32)
        self.project_class_w = jnp.zeros((y_class, Cc), jnp.float32)
        self.project_class_b = jnp.zeros((y_class,), jnp.float32)
        self.prior_h = jnp.zeros((1, 2 * Cc), jnp.float32)

    # ---- parameter preprocessing: time-channel folding, bf16 weights, masks ----
    def _prep_cnf_block(self, params, n_batch, C, H, W, atol, rtol):
        NB = _pick_batch_block(n_batch, H * W)
        specs, flat = [], []
        ones = jnp.ones((1, H, W, 1), jnp.float32)
        for (w, b) in params:
            cin, cout = w.shape[2] - 1, w.shape[3]
            specs.append((cin, cout))
            # spatial part (time channel removed), taps folded into K: (9*cin, cout)
            w_sp = w[:, :, 1:, :].reshape(9 * cin, cout).astype(jnp.bfloat16)
            # per-pixel time-channel map: conv of a ones-plane (zero padded,
            # exactly like the tt plane in ConcatConv2d) with w[:, :, 0, :].
            tmap = jax.lax.conv_general_dilated(
                ones, w[:, :, 0:1, :], window_strides=(1, 1), padding="SAME",
                dimension_numbers=("NHWC", "HWIO", "NHWC"))[0].reshape(H * W, cout)
            flat += [w_sp, b.reshape(1, cout), jnp.tile(tmap, (NB, 1))]
        solve = _make_cnf_solver(n_batch, NB, H, W, C, tuple(specs),
                                 self.T, self.n_ode_steps)
        return dict(solve_fn=solve, flat_params=flat,
                    mask9=_make_tap_masks(H, W, NB), atol=atol, rtol=rtol)

    @staticmethod
    def _calc_n_scale(input_size):
        _, _, h, w = input_size
        n_scale = 0
        while h >= 4 and w >= 4:
            n_scale += 1
            h //= 2
            w //= 2
        return n_scale

    def calc_output_size(self, input_size):
        n, c, h, w = input_size
        output_sizes = []
        for i in range(self.n_scale):
            if i < self.n_scale - 1:
                c *= 2
                h //= 2
                w //= 2
            output_sizes.append((n, c, h, w))
        return tuple(output_sizes)

    # ---- CNF_Gate_Sep.forward (reverse=False): d/dt [z, logp] = [f, -div f] ----
    def _cnf_solve(self, block, x_nchw, logpx, key):
        # TODO(synk): adaptive dopri5 + RL tolerance gate (atol/rtol policy,
        # logp_actions, separate fwd/rev tolerances) have no Pallas equivalent;
        # fixed-step RK4 is used and gate outputs are returned as constants.
        n, c, h, w = x_nchw.shape
        x_nhwc = jnp.transpose(x_nchw, (0, 2, 3, 1))
        # TODO(synk): reference configs often use Rademacher Hutchinson noise;
        # Gaussian is used here (estimator remains unbiased).
        e = jax.random.normal(key, x_nhwc.shape, jnp.float32)
        x_flat = x_nhwc.reshape(n * h * w, c)
        e_flat = e.reshape(n * h * w, c)
        xo_flat, lp128 = block["solve_fn"](x_flat, e_flat, block["mask9"],
                                           *block["flat_params"])
        x_out = jnp.transpose(xo_flat.reshape(n, h, w, c), (0, 3, 1, 2))
        logpx = logpx + lp128[:, :1]
        return (x_out, logpx, [block["atol"]], [block["rtol"]],
                [jnp.zeros((), jnp.float32)], [4 * self.n_ode_steps])

    # ---- StackedCNFLayers.forward for one scale ----
    def _stacked_forward(self, scale_idx, x, logpx):
        sc = self.scales[scale_idx]
        atol_l, rtol_l, lpa_l, nfe_l = [], [], [], []
        if sc["init_logit"]:
            x, ld = logit_transform(x, self.alpha)
            logpx = logpx - ld
        blk = 0
        for block in sc["pre"]:
            key = jax.random.fold_in(self.noise_key, scale_idx * 1000 + blk)
            x, logpx, al, rl, ll, nl = self._cnf_solve(block, x, logpx, key)
            atol_l += al; rtol_l += rl; lpa_l += ll; nfe_l += nl
            blk += 1
        if sc["squeeze"]:
            x = squeeze_nchw(x, 2)
            for block in sc["post"]:
                key = jax.random.fold_in(self.noise_key, scale_idx * 1000 + blk)
                x, logpx, al, rl, ll, nl = self._cnf_solve(block, x, logpx, key)
                atol_l += al; rtol_l += rl; lpa_l += ll; nfe_l += nl
                blk += 1
        return x, logpx, atol_l, rtol_l, lpa_l, nfe_l

    # ---- ODENVP._logdensity ----
    def forward(self, x, logpx=None):
        n = x.shape[0]
        _logpx = jnp.zeros((n, 1), x.dtype) if logpx is None else logpx
        out, atol_list, rtol_list, logpa_list, nfe_list = [], [], [], [], []
        for idx in range(len(self.scales)):
            x, _logpx, al, rl, ll, nl = self._stacked_forward(idx, x, _logpx)
            if idx < len(self.scales) - 1:
                d = x.shape[1] // 2
                x, factor_out = x[:, :d], x[:, d:]
            else:
                factor_out = x
            out.append(factor_out)
            atol_list += al; rtol_list += rl; logpa_list += ll; nfe_list += nl
        out = [o.reshape(o.shape[0], -1) for o in out]
        out = jnp.concatenate(out, axis=1)
        if logpx is None:
            return out, atol_list, rtol_list, logpa_list, nfe_list
        return out, _logpx, atol_list, rtol_list, logpa_list, nfe_list


# ----------------------------------- main ------------------------------------

if __name__ == "__main__":
    key = jax.random.PRNGKey(0)
    N, C, H, W = 2, 4, 8, 8
    x = jax.random.uniform(key, (N, C, H, W), jnp.float32)   # image data in [0,1)

    model = ODENVPPallas((N, C, H, W), n_blocks=1, intermediate_dims=(16,),
                         alpha=0.05, T=1.0, n_ode_steps=2, seed=0)

    logpx0 = jnp.zeros((N, 1), jnp.float32)
    out, logpx, atols, rtols, logpas, nfes = model.forward(x, logpx0)

    out = jax.block_until_ready(out)
    logpx = jax.block_until_ready(logpx)

    assert out.shape == (N, C * H * W), out.shape
    assert logpx.shape == (N, 1), logpx.shape
    assert len(atols) == len(rtols) == len(nfes) == 3   # 3 CNF blocks total
    assert bool(jnp.all(jnp.isfinite(out))) and bool(jnp.all(jnp.isfinite(logpx)))
    print("KERNEL_OK")
</pallas_src>

<mosaic_0001>
module attributes {stable_mosaic.version = 11 : i64} {
  func.func @_logit_kernel(%arg0: i32, %arg1: memref<2x256xf32, #tpu.memory_space<vmem>>, %arg2: memref<2x256xf32, #tpu.memory_space<vmem>>, %arg3: memref<2x1xf32, #tpu.memory_space<vmem>>) attributes {dimension_semantics = [#tpu.dimension_semantics<parallel>], iteration_bounds = array<i64: 1>, scalar_prefetch = 0 : i64, scratch_operands = 0 : i64, tpu.core_type = #tpu.core_type<tc>, window_params = [{transform_indices = @transform_0, window_bounds = array<i64: 2, 256>}, {transform_indices = @transform_1, window_bounds = array<i64: 2, 256>}, {transform_indices = @transform_2, window_bounds = array<i64: 2, 1>}]} {
    %c0 = arith.constant 0 : index
    %c0_0 = arith.constant 0 : index
    %0 = vector.load %arg1[%c0, %c0_0] : memref<2x256xf32, #tpu.memory_space<vmem>>, vector<2x256xf32>
    %cst = arith.constant 0.899999976 : f32
    %1 = vector.broadcast %cst : f32 to vector<2x256xf32>
    %2 = arith.mulf %1, %0 : vector<2x256xf32>
    %cst_1 = arith.constant 5.000000e-02 : f32
    %3 = vector.broadcast %cst_1 : f32 to vector<2x256xf32>
    %4 = arith.addf %3, %2 : vector<2x256xf32>
    %5 = math.log %4 : vector<2x256xf32>
    %cst_2 = arith.constant 1.000000e+00 : f32
    %6 = vector.broadcast %cst_2 : f32 to vector<2x256xf32>
    %7 = arith.subf %6, %4 : vector<2x256xf32>
    %8 = math.log %7 : vector<2x256xf32>
    %9 = arith.subf %5, %8 : vector<2x256xf32>
    %c0_3 = arith.constant 0 : index
    %c0_4 = arith.constant 0 : index
    %10 = vector.load %arg2[%c0_3, %c0_4] : memref<2x256xf32, #tpu.memory_space<vmem>>, vector<2x256xf32>
    tpu.vector_store %arg2[%c0_3, %c0_4], %9 {strides = array<i32>} : memref<2x256xf32, #tpu.memory_space<vmem>>, vector<2x256xf32>,
    %11 = math.log %4 : vector<2x256xf32>
    %cst_5 = arith.constant -0.105360515 : f32
    %12 = vector.broadcast %cst_5 : f32 to vector<2x256xf32>
    %13 = arith.subf %12, %11 : vector<2x256xf32>
    %cst_6 = arith.constant 1.000000e+00 : f32
    %14 = vector.broadcast %cst_6 : f32 to vector<2x256xf32>
    %15 = arith.subf %14, %4 : vector<2x256xf32>
    %16 = math.log %15 : vector<2x256xf32>
    %17 = arith.subf %13, %16 : vector<2x256xf32>
    %cst_7 = arith.constant dense<0.000000e+00> : vector<2xf32>
    %18 = vector.multi_reduction <add>, %17, %cst_7 [1] : vector<2x256xf32> to vector<2xf32>
    %19 = vector.shape_cast %18 : vector<2xf32> to vector<2x1xf32>
    %c0_8 = arith.constant 0 : index
    %c0_9 = arith.constant 0 : index
    %20 = vector.load %arg3[%c0_8, %c0_9] : memref<2x1xf32, #tpu.memory_space<vmem>>, vector<2x1xf32>
    tpu.vector_store %arg3[%c0_8, %c0_9], %19 {strides = array<i32>} : memref<2x1xf32, #tpu.memory_space<vmem>>, vector<2x1xf32>,
    return
  }
  func.func @transform_0(%arg0: i32) -> (i32, i32) {
    %c0_i32 = arith.constant 0 : i32
    %c0_i32_0 = arith.constant 0 : i32
    return %arg0, %c0_i32 : i32, i32
  }
  func.func @transform_1(%arg0: i32) -> (i32, i32) {
    %c0_i32 = arith.constant 0 : i32
    %c0_i32_0 = arith.constant 0 : i32
    return %arg0, %c0_i32 : i32, i32
  }
  func.func @transform_2(%arg0: i32) -> (i32, i32) {
    %c0_i32 = arith.constant 0 : i32
    %c0_i32_0 = arith.constant 0 : i32
    return %arg0, %c0_i32 : i32, i32
  }
}

</mosaic_0001>

<llo_original>
// kernel: tpu_custom_call.1
$region0: #{tpu_custom_call.1}
  #allocation0 [shape = 'u32[]', space=smem, size = 0x4, offset = 0x4, fixed_abs, tag = 'smem constant byte address 0x4 - core index']
  #allocation1 [shape = 'u32[144,128]{1,0:T(1,128)}', space=vmem, size = 0x12000, scoped, tag = 'internal scratch']
  %s0 = inlined_call_operand.hbm [shape: f32[2,256], index: 0, kind: input, shape index: {}]
  %s1 = inlined_call_operand.hbm [shape: f32[2,256], index: 1, kind: output, shape index: {0}]
  %s2 = inlined_call_operand.vmem [shape: f32[2,1], index: 2, kind: output, shape index: {1}]
  %3 = xla_tuple %s1, %s2
  %s4 = sld [smem:[#allocation0]]
  $region26: #{tpu_custom_call.1} parent=0
    _
  %s6 = ssub.s32 1, %s4
  %s7 = scalar_select 0, %s6, %s4
  $region1: #{tpu_custom_call.1} parent=0
    #allocation2 [shape = 'u8[2048]{0}', space=vmem, size = 0x800, scoped, tag = 'input window, operand 0, single buffered']
    #allocation3 [shape = 's32[1]{0}', space=sflag, size = 0x4, scoped, tag = 'scoped memory for tpu_custom_call.1']
    #allocation4 [shape = 's32[1]{0}', space=sflag, size = 0x4, scoped, tag = 'scoped memory for tpu_custom_call.1']
    #allocation5 [shape = 'u8[2048]{0}', space=vmem, size = 0x800, scoped, tag = 'output window, operand 0, single buffered']
    %8 = vsyncpa [#allocation3], 0
    %9 = vsyncpa [#allocation4], 0
    // Predicated region
    $region2: #{tpu_custom_call.1} parent=1 // pred_check
      _
    $region3: #{tpu_custom_call.1} parent=1 // pred_check_branch
      %11 = sbr.rel (0) target = $region5
    $region4: #{tpu_custom_call.1} parent=1 // pred_region
      %s13 = ssub.s32 64, 64
      %14 = vsyncadd [#allocation3], %s13
      %s16 = sshll.u32 [#allocation2], 4
      %s17 = int_to_ptr.vmem [resolvable:$true] %s16
      %19 = dma.hbm_to_vmem [thread:$0]  %s0, 64, %s17, [#allocation3]
    $region5: #{tpu_custom_call.1} parent=1 // pred_fallthru
      _
    // Predicated region
    $region6: #{tpu_custom_call.1} parent=1 // pred_check
      _
    $region7: #{tpu_custom_call.1} parent=1 // pred_check_branch
      %21 = sbr.rel (0) target = $region9
    $region8: #{tpu_custom_call.1} parent=1 // pred_region
      %22 = dma.done [#allocation3], 64
    $region9: #{tpu_custom_call.1} parent=1 // pred_fallthru
      _
    %v23 = vld [vmem:[#allocation2] sm:$0xf]
    %v24 = vmul.f32 %v23, 0.9
    %v25 = vadd.f32 %v24, 0.05
    %v26 = vlog2.pop %v25
    %v27 = vmul.f32 %v26, 0.6931472
    %v28 = vsub.f32 1.0, %v25
    %v29 = vlog2.pop %v28
    %v30 = vmul.f32 %v29, 0.6931472
    %v31 = vsub.f32 %v27, %v30
    %32 = vst [vmem:[#allocation5] sm:$0xf] %v31
    %v33 = vsub.f32 -0.105360515, %v27
    %v34 = vsub.f32 %v33, %v30
    %v37 = vunpack.c.l.s4 1983009808
    %v38 = vunpack.c.0.s8 %v37
    %v39 = vlaneseq
    %v40 = vshrl.u32 %v39, 7
    %v41 = vsub.s32 %v38, %v40
    %v42 = vrot.slane %v34, %v41
    %v43 = vcombine.high %v42, %v42
    %vm46 = vcmask 1041408
    %v47 = vsel %vm46, %v42, 0.0
    %v48 = vsel %vm46, %v43, 0.0
    %v49 = vadd.f32 %v47, %v48
    %50 = vadd.xlane.f32.xlu0 %v49
    %v51 = vpop.xlane.xlu0 %50
    %vm52 = vcmask 1024
    %53 = vst.msk [vmem:[%s2] sm:$0x3] %vm52, %v51
    // Predicated region
    $region10: #{tpu_custom_call.1} parent=1 // pred_check
      _
    $region11: #{tpu_custom_call.1} parent=1 // pred_check_branch
      %55 = sbr.rel (0) target = $region13
    $region12: #{tpu_custom_call.1} parent=1 // pred_region
      %s57 = ssub.s32 64, 64
      %58 = vsyncadd [#allocation4], %s57
      %s60 = sshll.u32 [#allocation5], 4
      %s61 = int_to_ptr.vmem [resolvable:$true] %s60
      %63 = dma.vmem_to_hbm [thread:$0]  %s61, 64, %s1, [#allocation4]
    $region13: #{tpu_custom_call.1} parent=1 // pred_fallthru
      _
    // Predicated region
    $region14: #{tpu_custom_call.1} parent=1 // pred_check
      _
    $region15: #{tpu_custom_call.1} parent=1 // pred_check_branch
      %65 = sbr.rel (0) target = $region17
    $region16: #{tpu_custom_call.1} parent=1 // pred_region
      _
    $region17: #{tpu_custom_call.1} parent=1 // pred_fallthru
      _
    // Predicated region
    $region18: #{tpu_custom_call.1} parent=1 // pred_check
      _
    $region19: #{tpu_custom_call.1} parent=1 // pred_check_branch
      %67 = sbr.rel (0) target = $region21
    $region20: #{tpu_custom_call.1} parent=1 // pred_region
      %68 = dma.done [#allocation4], 64
    $region21: #{tpu_custom_call.1} parent=1 // pred_fallthru
      _
    // Predicated region
    $region22: #{tpu_custom_call.1} parent=1 // pred_check
      _
    $region23: #{tpu_custom_call.1} parent=1 // pred_check_branch
      %70 = sbr.rel (0) target = $region25
    $region24: #{tpu_custom_call.1} parent=1 // pred_region
      _
    $region25: #{tpu_custom_call.1} parent=1 // pred_fallthru
      _
    %71 = vsyncpa [#allocation3], 1
    %72 = vsyncpa [#allocation4], 1

</llo_original>
